<compile_context>
chip_gen: v6e
topology: v6e:2x2x1
jax: 0.10.0
libtpu: 0.0.40
codegen_flags: <defaults>
</compile_context>

<pallas_src>
import math
from functools import partial

import jax
import jax.numpy as jnp
from jax.experimental import pallas as pl
from jax.experimental.pallas import tpu as pltpu


def _automasked_acc_kernel(pred_ref, gold_ref, out_ref, *,
                           logit_threshold, maskid, trueid, batch_size, block_b):
    pred = pred_ref[...]                                  # (TB, S), native float dtype
    gold = gold_ref[...]                                  # (TB, S), native int dtype

    # sigmoid(pred) > threshold  <=>  pred > logit(threshold)   (monotonic, no EUP work)
    p_bin = pred > logit_threshold                        # bool (TB, S)
    mask = gold != maskid                                 # bool (TB, S)
    realgold = gold == trueid                             # bool (TB, S)

    # Row is an exact match iff NO position has (pred != realgold) under the mask.
    mismatch = jnp.logical_and(p_bin != realgold, mask).astype(jnp.float32)
    worst = jnp.max(mismatch, axis=1, keepdims=True)      # (TB, 1): 0.0 iff exact match

    # Mask padded batch rows (last grid tile may be ragged).
    row_ids = (pl.program_id(0) * block_b
               + jax.lax.broadcasted_iota(jnp.int32, (block_b, 1), 0))
    valid = (row_ids < batch_size).astype(jnp.float32)    # (TB, 1)

    out_ref[...] = (1.0 - worst) * valid                  # 1.0 per correct (valid) row


def automasked_binary_seq_accuracy(pred, gold, *, mode='logits', threshold=0.5,
                                   reduction='mean', maskid=0, trueid=2,
                                   block_b=None):
    assert reduction in ('mean', 'sum', 'none')
    B, S = pred.shape
    assert gold.shape == (B, S)

    if mode == 'logits':
        assert 0.0 < threshold < 1.0
        logit_threshold = float(math.log(threshold / (1.0 - threshold)))
    else:
        logit_threshold = float(threshold)

    # Batch tile: full B if it fits, otherwise a multiple of 8 sized so that the
    # double-buffered inputs (2 bufs x (pred+gold) rows) stay well under the default
    # scoped VMEM limit (16 MiB on v5e, 32 MiB on v6e/v7x) with headroom for
    # in-kernel intermediates. Sequence axis is kept at full extent (exempt from the
    # (8,128) rule and avoids partial-lane tiles).
    if block_b is None:
        bytes_per_row = S * (pred.dtype.itemsize + gold.dtype.itemsize)
        tb = (8 * 1024 * 1024) // (2 * max(bytes_per_row, 1))   # ~8 MiB of input buffers
        tb = max(8, min(1024, (tb // 8) * 8))
        block_b = B if B <= tb else tb
    grid_b = pl.cdiv(B, block_b)
    b_pad = grid_b * block_b

    kernel = partial(_automasked_acc_kernel,
                     logit_threshold=logit_threshold,
                     maskid=int(maskid),
                     trueid=int(trueid),
                     batch_size=int(B),
                     block_b=int(block_b))

    cost = pl.CostEstimate(
        flops=6 * B * S,
        transcendentals=0,
        bytes_accessed=B * S * (pred.dtype.itemsize + gold.dtype.itemsize) + b_pad * 4)

    correct = pl.pallas_call(
        kernel,
        out_shape=jax.ShapeDtypeStruct((b_pad, 1), jnp.float32),
        grid=(grid_b,),
        in_specs=[pl.BlockSpec((block_b, S), lambda i: (i, 0)),
                  pl.BlockSpec((block_b, S), lambda i: (i, 0))],
        out_specs=pl.BlockSpec((block_b, 1), lambda i: (i, 0)),
        compiler_params=pltpu.CompilerParams(
            dimension_semantics=("parallel",)),   # independent tiles -> both TCs on v7x
        cost_estimate=cost,
    )(pred, gold)

    correct = correct[:, 0]                        # (b_pad,), padded rows are exactly 0.0
    if reduction == 'mean':
        return jnp.sum(correct) / jnp.float32(B)
    elif reduction == 'sum':
        return jnp.sum(correct)
    else:  # 'none'
        return correct[:B]


def _reference(pred, gold, *, threshold=0.5, maskid=0, trueid=2, reduction='mean'):
    p = jax.nn.sigmoid(pred.astype(jnp.float32)) > threshold
    mask = gold != maskid
    realgold = gold == trueid
    same = (p == realgold) | ~mask
    same = same.astype(jnp.int32).sum(axis=1)
    same = (same == gold.shape[1]).astype(jnp.float32)
    if reduction == 'mean':
        return same.mean()
    elif reduction == 'sum':
        return same.sum()
    return same


if __name__ == "__main__":
    key = jax.random.PRNGKey(0)
    k1, k2, k3, k4 = jax.random.split(key, 4)

    # Small primary test: (batch=2, seq=8), f32 logits, int32 gold ids in {0,1,2}.
    B, S = 2, 8
    pred = jax.random.normal(k1, (B, S), dtype=jnp.float32)
    gold = jax.random.randint(k2, (B, S), 0, 3, dtype=jnp.int32)

    out = jax.block_until_ready(automasked_binary_seq_accuracy(pred, gold))
    ref = _reference(pred, gold)
    assert jnp.allclose(out, ref, atol=1e-6), (out, ref)

    out_sum = jax.block_until_ready(
        automasked_binary_seq_accuracy(pred, gold, reduction='sum'))
    ref_sum = _reference(pred, gold, reduction='sum')
    assert jnp.allclose(out_sum, ref_sum, atol=1e-6), (out_sum, ref_sum)

    # Exercise the tiled / ragged-batch path: B=20 with a forced block of 8 (grid=3,
    # last tile has 4 padded rows that must be masked out).
    B2, S2 = 20, 256
    pred2 = jax.random.normal(k3, (B2, S2), dtype=jnp.float32)
    gold2 = jax.random.randint(k4, (B2, S2), 0, 3, dtype=jnp.int32)
    out2 = jax.block_until_ready(
        automasked_binary_seq_accuracy(pred2, gold2, block_b=8))
    ref2 = _reference(pred2, gold2)
    assert jnp.allclose(out2, ref2, atol=1e-6), (out2, ref2)

    print("KERNEL_OK")
</pallas_src>

<mosaic_0001>
module attributes {stable_mosaic.version = 11 : i64} {
  func.func @_automasked_acc_kernel(%arg0: i32, %arg1: memref<2x8xf32, #tpu.memory_space<vmem>>, %arg2: memref<2x8xi32, #tpu.memory_space<vmem>>, %arg3: memref<2x1xf32, #tpu.memory_space<vmem>>) attributes {dimension_semantics = [#tpu.dimension_semantics<parallel>], iteration_bounds = array<i64: 1>, scalar_prefetch = 0 : i64, scratch_operands = 0 : i64, tpu.core_type = #tpu.core_type<tc>, window_params = [{transform_indices = @transform_0, window_bounds = array<i64: 2, 8>}, {transform_indices = @transform_1, window_bounds = array<i64: 2, 8>}, {transform_indices = @transform_2, window_bounds = array<i64: 2, 1>}]} {
    %c0 = arith.constant 0 : index
    %c0_0 = arith.constant 0 : index
    %0 = vector.load %arg1[%c0, %c0_0] : memref<2x8xf32, #tpu.memory_space<vmem>>, vector<2x8xf32>
    %c0_1 = arith.constant 0 : index
    %c0_2 = arith.constant 0 : index
    %1 = vector.load %arg2[%c0_1, %c0_2] : memref<2x8xi32, #tpu.memory_space<vmem>>, vector<2x8xi32>
    %cst = arith.constant 0.000000e+00 : f32
    %2 = vector.broadcast %cst : f32 to vector<2x8xf32>
    %3 = arith.cmpf ogt, %0, %2 : vector<2x8xf32>
    %c0_i32 = arith.constant 0 : i32
    %4 = vector.broadcast %c0_i32 : i32 to vector<2x8xi32>
    %5 = arith.cmpi ne, %1, %4 : vector<2x8xi32>
    %c2_i32 = arith.constant 2 : i32
    %6 = vector.broadcast %c2_i32 : i32 to vector<2x8xi32>
    %7 = arith.cmpi eq, %1, %6 : vector<2x8xi32>
    %8 = arith.xori %3, %7 : vector<2x8xi1>
    %9 = arith.andi %8, %5 : vector<2x8xi1>
    %10 = arith.extui %9 : vector<2x8xi1> to vector<2x8xi32>
    %11 = arith.sitofp %10 : vector<2x8xi32> to vector<2x8xf32>
    %cst_3 = arith.constant dense<0xFF800000> : vector<2xf32>
    %12 = vector.multi_reduction <maximumf>, %11, %cst_3 [1] : vector<2x8xf32> to vector<2xf32>
    %13 = vector.shape_cast %12 : vector<2xf32> to vector<2x1xf32>
    %c2_i32_4 = arith.constant 2 : i32
    %14 = arith.muli %arg0, %c2_i32_4 : i32
    %15 = tpu.iota {dimensions = array<i32: 0>} : vector<2x1xi32>
    %16 = vector.broadcast %14 : i32 to vector<2x1xi32>
    %17 = arith.addi %16, %15 : vector<2x1xi32>
    %c2_i32_5 = arith.constant 2 : i32
    %18 = vector.broadcast %c2_i32_5 : i32 to vector<2x1xi32>
    %19 = arith.cmpi slt, %17, %18 : vector<2x1xi32>
    %20 = arith.extui %19 : vector<2x1xi1> to vector<2x1xi32>
    %21 = arith.sitofp %20 : vector<2x1xi32> to vector<2x1xf32>
    %cst_6 = arith.constant 1.000000e+00 : f32
    %22 = vector.broadcast %cst_6 : f32 to vector<2x1xf32>
    %23 = arith.subf %22, %13 : vector<2x1xf32>
    %24 = arith.mulf %23, %21 : vector<2x1xf32>
    %c0_7 = arith.constant 0 : index
    %c0_8 = arith.constant 0 : index
    %25 = vector.load %arg3[%c0_7, %c0_8] : memref<2x1xf32, #tpu.memory_space<vmem>>, vector<2x1xf32>
    tpu.vector_store %arg3[%c0_7, %c0_8], %24 {strides = array<i32>} : memref<2x1xf32, #tpu.memory_space<vmem>>, vector<2x1xf32>,
    return
  }
  func.func @transform_0(%arg0: i32) -> (i32, i32) {
    %c0_i32 = arith.constant 0 : i32
    %c0_i32_0 = arith.constant 0 : i32
    return %arg0, %c0_i32 : i32, i32
  }
  func.func @transform_1(%arg0: i32) -> (i32, i32) {
    %c0_i32 = arith.constant 0 : i32
    %c0_i32_0 = arith.constant 0 : i32
    return %arg0, %c0_i32 : i32, i32
  }
  func.func @transform_2(%arg0: i32) -> (i32, i32) {
    %c0_i32 = arith.constant 0 : i32
    %c0_i32_0 = arith.constant 0 : i32
    return %arg0, %c0_i32 : i32, i32
  }
}

</mosaic_0001>

<llo_original>
// kernel: tpu_custom_call.1
$region0: #{tpu_custom_call.1}
  #allocation0 [shape = 'u32[]', space=smem, size = 0x4, offset = 0x4, fixed_abs, tag = 'smem constant byte address 0x4 - core index']
  #allocation1 [shape = 'u32[144,128]{1,0:T(1,128)}', space=vmem, size = 0x12000, scoped, tag = 'internal scratch']
  %s0 = inlined_call_operand.hbm [shape: f32[2,8], index: 0, kind: input, shape index: {}]
  %s1 = inlined_call_operand.hbm [shape: s32[2,8], index: 1, kind: input, shape index: {}]
  %s2 = inlined_call_operand.vmem [shape: f32[2,1], index: 2, kind: output, shape index: {}]
  %s3 = sld [smem:[#allocation0]]
  $region26: #{tpu_custom_call.1} parent=0
    _
  %s5 = ssub.s32 1, %s3
  %s6 = scalar_select 0, %s5, %s3
  $region1: #{tpu_custom_call.1} parent=0
    #allocation2 [shape = 'u8[1024]{0}', space=vmem, size = 0x400, scoped, tag = 'input window, operand 0, single buffered']
    #allocation3 [shape = 's32[1]{0}', space=sflag, size = 0x4, scoped, tag = 'scoped memory for tpu_custom_call.1']
    #allocation4 [shape = 'u8[1024]{0}', space=vmem, size = 0x400, scoped, tag = 'input window, operand 1, single buffered']
    #allocation5 [shape = 's32[1]{0}', space=sflag, size = 0x4, scoped, tag = 'scoped memory for tpu_custom_call.1']
    %7 = vsyncpa [#allocation3], 0
    %8 = vsyncpa [#allocation5], 0
    // Predicated region
    $region2: #{tpu_custom_call.1} parent=1 // pred_check
      _
    $region3: #{tpu_custom_call.1} parent=1 // pred_check_branch
      %10 = sbr.rel (0) target = $region5
    $region4: #{tpu_custom_call.1} parent=1 // pred_region
      %s12 = ssub.s32 32, 32
      %13 = vsyncadd [#allocation3], %s12
      %s15 = sshll.u32 [#allocation2], 4
      %s16 = int_to_ptr.vmem [resolvable:$true] %s15
      %18 = dma.hbm_to_vmem [thread:$0]  %s0, 32, %s16, [#allocation3]
    $region5: #{tpu_custom_call.1} parent=1 // pred_fallthru
      _
    // Predicated region
    $region6: #{tpu_custom_call.1} parent=1 // pred_check
      _
    $region7: #{tpu_custom_call.1} parent=1 // pred_check_branch
      %20 = sbr.rel (0) target = $region9
    $region8: #{tpu_custom_call.1} parent=1 // pred_region
      %s22 = ssub.s32 32, 32
      %23 = vsyncadd [#allocation5], %s22
      %s25 = sshll.u32 [#allocation4], 4
      %s26 = int_to_ptr.vmem [resolvable:$true] %s25
      %28 = dma.hbm_to_vmem [thread:$0]  %s1, 32, %s26, [#allocation5]
    $region9: #{tpu_custom_call.1} parent=1 // pred_fallthru
      _
    // Predicated region
    $region10: #{tpu_custom_call.1} parent=1 // pred_check
      _
    $region11: #{tpu_custom_call.1} parent=1 // pred_check_branch
      %30 = sbr.rel (0) target = $region13
    $region12: #{tpu_custom_call.1} parent=1 // pred_region
      %31 = dma.done [#allocation3], 32
    $region13: #{tpu_custom_call.1} parent=1 // pred_fallthru
      _
    // Predicated region
    $region14: #{tpu_custom_call.1} parent=1 // pred_check
      _
    $region15: #{tpu_custom_call.1} parent=1 // pred_check_branch
      %33 = sbr.rel (0) target = $region17
    $region16: #{tpu_custom_call.1} parent=1 // pred_region
      %34 = dma.done [#allocation5], 32
    $region17: #{tpu_custom_call.1} parent=1 // pred_fallthru
      _
    %v35 = vld [vmem:[#allocation2] sm:$0x3]
    %v36 = vld [vmem:[#allocation4] sm:$0x3]
    %vm37 = vcmp.gt.f32.partialorder %v35, 0.0
    %vm38 = vcmp.ne.s32.totalorder %v36, 0
    %vm39 = vcmp.eq.s32.totalorder %v36, 2
    %vm40 = vmxor %vm37, %vm39
    %vm41 = vmand %vm40, %vm38
    %v42 = vsel %vm41, 1, 0
    %v43 = vcvt.s32.f32 %v42
    %vm44 = vcmask 58368
    %v45 = vsel %vm44, %v43, -inf
    %46 = vmax.xlane.f32.xlu0 %v45
    %v47 = vpop.xlane.xlu0 %46
    %s48 = smul.u32 0, 2
    %v49 = vlaneseq
    %v50 = vshrl.u32 %v49, 7
    %v51 = vstv %s48
    %v52 = vadd.s32 %v51, %v50
    %vm53 = vcmp.lt.s32.totalorder %v52, 2
    %v54 = vsel %vm53, 1, 0
    %v55 = vcvt.s32.f32 %v54
    %v56 = vsub.f32 1.0, %v47
    %v57 = vmul.f32 %v56, %v55
    %vm58 = vcmask 1024
    %59 = vst.msk [vmem:[%s2] sm:$0x3] %vm58, %v57
    // Predicated region
    $region18: #{tpu_custom_call.1} parent=1 // pred_check
      _
    $region19: #{tpu_custom_call.1} parent=1 // pred_check_branch
      %61 = sbr.rel (0) target = $region21
    $region20: #{tpu_custom_call.1} parent=1 // pred_region
      _
    $region21: #{tpu_custom_call.1} parent=1 // pred_fallthru
      _
    // Predicated region
    $region22: #{tpu_custom_call.1} parent=1 // pred_check
      _
    $region23: #{tpu_custom_call.1} parent=1 // pred_check_branch
      %63 = sbr.rel (0) target = $region25
    $region24: #{tpu_custom_call.1} parent=1 // pred_region
      _
    $region25: #{tpu_custom_call.1} parent=1 // pred_fallthru
      _
    %64 = vsyncpa [#allocation3], 1
    %65 = vsyncpa [#allocation5], 1

</llo_original>
